<compile_context>
chip_gen: v7x
topology: tpu7x:2x2x1
jax: 0.10.0
libtpu: 0.0.40
codegen_flags: <defaults>
</compile_context>

<pallas_src>
import functools

import jax
import jax.numpy as jnp
from jax.experimental import pallas as pl
from jax.experimental.pallas import tpu as pltpu


def _round_up(x, m):
    return (x + m - 1) // m * m


def _pick_tile(n_rows, tn):
    """Pick a row tile that avoids padding the activations when possible.

    Returns (tile, needs_pad). tile is either the full extent (n_rows <= tn),
    a multiple of 8 that divides n_rows, or (fallback) a multiple of 8 with
    needs_pad=True.
    """
    if n_rows <= tn:
        return n_rows, False                  # single full-extent block
    t = min(tn, n_rows) // 8 * 8
    while t >= 8:
        if n_rows % t == 0:
            return t, False
        t -= 8
    return tn // 8 * 8, True                  # fallback: pad rows to a multiple of tn


def _bilinear_kernel(*refs, pkp, has_right, skip_m):
    idx = 0
    left_ref = refs[idx]; idx += 1
    right_ref = None
    if has_right:
        right_ref = refs[idx]; idx += 1
    wl_ref = refs[idx]; idx += 1
    wr_ref = None
    if has_right:
        wr_ref = refs[idx]; idx += 1
    m_ref = None
    if not skip_m:
        m_ref = refs[idx]; idx += 1
    bias_ref = refs[idx]; idx += 1
    out_ref = refs[idx]

    # (TN, L) @ (L, PKp + Op): bilinear left-projection and linear_a in one matmul.
    u = jnp.dot(left_ref[...], wl_ref[...], preferred_element_type=jnp.float32)
    if has_right:
        # (TN, R) @ (R, PKp + Op): bilinear right-projection and linear_b.
        v = jnp.dot(right_ref[...], wr_ref[...], preferred_element_type=jnp.float32)
        prod = u[:, :pkp] * v[:, :pkp]      # bilinear pool (pre rank-sum), f32 VPU
        lin = u[:, pkp:] + v[:, pkp:]       # linear_a + linear_b terms, f32
    else:
        prod = u[:, :pkp]                   # right omitted -> rank-sum of wa_left only
        lin = u[:, pkp:]

    if skip_m:
        # Default config (rank 1, w_o None): M is a padded identity -> skip the matmul.
        bil = prod                          # PKp == Op in this case
    else:
        # Rank-sum + pool->out mapping folded into one (PKp, Op) f32 matmul
        # (kept f32: small, and avoids re-rounding prod to bf16).
        bil = jnp.dot(prod, m_ref[...], preferred_element_type=jnp.float32)
    out_ref[...] = (bil + lin + bias_ref[...]).astype(out_ref.dtype)


def pack_decomposed_bilinear(w_a, w_b, w_o=None, lin_a=None, lin_b=None, bias=None,
                             *, compute_dtype=jnp.bfloat16):
    """One-time parameter packing (output dim last, lane dense, zero padded).

    Run this once per parameter set and reuse the result across forward calls.
    """
    P, K, L = w_a.shape
    R = w_b.shape[-1]
    PK = P * K
    out_size = P if w_o is None else w_o.shape[-1]
    skip_m = (w_o is None) and (K == 1)      # M would be a padded identity
    PKp = _round_up(PK, 128)                 # lane-aligned pool*rank width
    Op = _round_up(out_size, 128)            # lane-dense output width
    f32 = jnp.float32

    wa_t = jnp.zeros((L, PKp), f32).at[:, :PK].set(w_a.reshape(PK, L).T)
    at_p = jnp.zeros((L, Op), f32)
    if lin_a is not None:
        at_p = at_p.at[:, :out_size].set(lin_a.T)
    wl = jnp.concatenate([wa_t, at_p], axis=1).astype(compute_dtype)      # (L, C)

    wb_t = jnp.zeros((R, PKp), f32).at[:, :PK].set(w_b.reshape(PK, R).T)
    bt_p = jnp.zeros((R, Op), f32)
    if lin_b is not None:
        bt_p = bt_p.at[:, :out_size].set(lin_b.T)
    wr = jnp.concatenate([wb_t, bt_p], axis=1).astype(compute_dtype)      # (R, C)

    m_p = None
    if not skip_m:
        if w_o is None:
            m_base = jnp.repeat(jnp.eye(P, dtype=f32), K, axis=0)         # (PK, P)
        else:
            m_base = jnp.repeat(w_o.astype(f32), K, axis=0)               # (PK, O)
        # Kept float32: the second matmul is small and f32 avoids bf16
        # double-rounding of the pool product.
        m_p = jnp.zeros((PKp, Op), f32).at[:PK, :out_size].set(m_base)

    bias_p = jnp.zeros((1, Op), f32)
    if bias is not None:
        bias_p = bias_p.at[0, :out_size].set(bias.astype(f32))

    return dict(wl=wl, wr=wr, m=m_p, bias=bias_p,
                left_size=L, right_size=R, out_size=out_size,
                pkp=PKp, op=Op, skip_m=skip_m,
                compute_dtype=jnp.dtype(compute_dtype))


# Cached probe: does this jax build support single-buffering constant blocks?
_WEIGHT_SINGLE_BUFFER_OK = None


def decomposed_bilinear_apply(packed, left, right=None, *, tn=512,
                              out_dtype=jnp.float32):
    """left: (*, L); right: (*, R) or None. Returns (*, out_size) in out_dtype."""
    global _WEIGHT_SINGLE_BUFFER_OK

    L = packed["left_size"]
    R = packed["right_size"]
    out_size = packed["out_size"]
    PKp = packed["pkp"]
    Op = packed["op"]
    skip_m = packed["skip_m"]
    cdt = packed["compute_dtype"]
    C = PKp + Op
    has_right = right is not None

    # ---- flatten the batch dimension; avoid activation padding when possible ----
    batch_shape = left.shape[:-1]
    left2 = left.reshape(-1, L).astype(cdt)
    N = left2.shape[0]
    right2 = right.reshape(-1, R).astype(cdt) if has_right else None

    tn = max(int(tn), 8)
    tn_eff, needs_pad = _pick_tile(N, tn)
    Np = N
    if needs_pad:
        Np = _round_up(N, tn_eff)
        left2 = jnp.pad(left2, ((0, Np - N), (0, 0)))
        if has_right:
            right2 = jnp.pad(right2, ((0, Np - N), (0, 0)))
    n_steps = Np // tn_eff

    kernel = functools.partial(_bilinear_kernel, pkp=PKp,
                               has_right=has_right, skip_m=skip_m)

    # ---- explicit scoped-VMEM budget (v5e scoped default 16 MiB; v7x 64 MiB phys) ----
    cb = jnp.dtype(cdt).itemsize
    ob = jnp.dtype(out_dtype).itemsize
    weight_bytes = (L * C * cb
                    + (R * C * cb if has_right else 0)
                    + (PKp * Op * 4 if not skip_m else 0)
                    + Op * 4)
    est = (2 * tn_eff * L * cb
           + (2 * tn_eff * R * cb if has_right else 0)
           + 2 * tn_eff * Op * ob
           + 2 * weight_bytes
           + 4 * tn_eff * C * (2 if has_right else 1)   # u, v f32 intermediates
           + 4 * tn_eff * (PKp + 2 * Op))               # prod / lin / bil temporaries
    vmem_limit = int(min(max(est + (8 << 20), 32 << 20), 64 << 20))

    def run(weight_buffers):
        def const_spec(shape):
            if weight_buffers == 1:
                # Grid-invariant blocks: no need to double-buffer them.
                return pl.BlockSpec(shape, lambda i: (0, 0),
                                    pipeline_mode=pl.Buffered(1))
            return pl.BlockSpec(shape, lambda i: (0, 0))

        in_specs = [pl.BlockSpec((tn_eff, L), lambda i: (i, 0))]
        inputs = [left2]
        if has_right:
            in_specs.append(pl.BlockSpec((tn_eff, R), lambda i: (i, 0)))
            inputs.append(right2)
        in_specs.append(const_spec((L, C)))
        inputs.append(packed["wl"])
        if has_right:
            in_specs.append(const_spec((R, C)))
            inputs.append(packed["wr"])
        if not skip_m:
            in_specs.append(const_spec((PKp, Op)))
            inputs.append(packed["m"])
        in_specs.append(const_spec((1, Op)))
        inputs.append(packed["bias"])

        return pl.pallas_call(
            kernel,
            out_shape=jax.ShapeDtypeStruct((Np, Op), out_dtype),
            grid_spec=pltpu.PrefetchScalarGridSpec(
                num_scalar_prefetch=0,
                grid=(n_steps,),
                in_specs=in_specs,
                out_specs=pl.BlockSpec((tn_eff, Op), lambda i: (i, 0)),
            ),
            compiler_params=pltpu.CompilerParams(
                dimension_semantics=("parallel",),
                vmem_limit_bytes=vmem_limit,
            ),
        )(*inputs)

    if _WEIGHT_SINGLE_BUFFER_OK is None:
        try:
            out = jax.block_until_ready(run(1))
            _WEIGHT_SINGLE_BUFFER_OK = True
        except Exception:
            # Older jax without pipeline_mode / Buffered(1): fall back cleanly.
            _WEIGHT_SINGLE_BUFFER_OK = False
            out = run(2)
    elif _WEIGHT_SINGLE_BUFFER_OK:
        out = run(1)
    else:
        out = run(2)

    if Np == N and Op == out_size:
        return out.reshape(*batch_shape, out_size)   # no extra slice pass
    return out[:N, :out_size].reshape(*batch_shape, out_size)


def decomposed_bilinear_forward(left, w_a, w_b, right=None, w_o=None,
                                lin_a=None, lin_b=None, bias=None,
                                *, tn=512, compute_dtype=jnp.bfloat16,
                                out_dtype=jnp.float32):
    """Convenience wrapper: pack every call. Prefer pack + apply for reuse."""
    packed = pack_decomposed_bilinear(w_a, w_b, w_o, lin_a, lin_b, bias,
                                      compute_dtype=compute_dtype)
    return decomposed_bilinear_apply(packed, left, right, tn=tn, out_dtype=out_dtype)


def reference_forward(left, w_a, w_b, right=None, w_o=None,
                      lin_a=None, lin_b=None, bias=None):
    """Pure-JAX mirror of DecomposedBilinear.forward."""
    batch_shape = left.shape[:-1]
    l2 = left.reshape(-1, left.shape[-1])
    wa_left = jnp.einsum("nl,pkl->npk", l2, w_a)
    if right is not None:
        r2 = right.reshape(-1, right.shape[-1])
        wb_right = jnp.einsum("nr,pkr->npk", r2, w_b)
        lwr = (wa_left * wb_right).sum(-1)
    else:
        lwr = wa_left.sum(-1)
    if w_o is not None:
        lwr = lwr @ w_o
    if bias is not None:
        lwr = lwr + bias
    if lin_a is not None:
        lwr = lwr + l2 @ lin_a.T
    if lin_b is not None and right is not None:
        lwr = lwr + r2 @ lin_b.T
    return lwr.reshape(*batch_shape, lwr.shape[-1])


if __name__ == "__main__":
    # Module config: DecomposedBilinear(left_size=32, right_size=16, out_size=24,
    #                                   decomposed_rank=4, pool_size=16,
    #                                   use_linear=True, use_bias=True)
    left_size, right_size, out_size = 32, 16, 24
    rank, pool = 4, 16            # pool != out  ->  w_o mapping is present
    batch, seq = 2, 8

    key = jax.random.PRNGKey(0)
    k_l, k_r, k_wa, k_wb, k_wo, k_a, k_b, k_bias = jax.random.split(key, 8)

    def uinit(k, shape, fan_in):
        bound = 1.0 / (fan_in ** 0.5)
        return jax.random.uniform(k, shape, jnp.float32, -bound, bound)

    w_a = uinit(k_wa, (pool, rank, left_size), left_size)
    w_b = uinit(k_wb, (pool, rank, right_size), right_size)
    w_o = uinit(k_wo, (pool, out_size), pool)
    lin_a = uinit(k_a, (out_size, left_size), left_size)
    lin_b = uinit(k_b, (out_size, right_size), right_size)
    bias = uinit(k_bias, (out_size,), pool)

    left = jax.random.normal(k_l, (batch, seq, left_size), jnp.float32)
    right = jax.random.normal(k_r, (batch, seq, right_size), jnp.float32)

    ref = reference_forward(left, w_a, w_b, right, w_o, lin_a, lin_b, bias)

    # Pack once per parameter set; reuse across forward calls.
    packed_f32 = pack_decomposed_bilinear(w_a, w_b, w_o, lin_a, lin_b, bias,
                                          compute_dtype=jnp.float32)
    packed_bf16 = pack_decomposed_bilinear(w_a, w_b, w_o, lin_a, lin_b, bias)  # bf16 default

    # f32 operand path (tight tolerance).
    out = jax.block_until_ready(decomposed_bilinear_apply(packed_f32, left, right))
    assert out.shape == (batch, seq, out_size)
    assert jnp.allclose(out, ref, rtol=1e-4, atol=1e-4), "f32 mismatch vs reference"

    # bf16 operands (default; recommended on v6e/v7x); f32 accumulation -> loose tolerance.
    out_bf16 = jax.block_until_ready(decomposed_bilinear_apply(packed_bf16, left, right))
    assert jnp.allclose(out_bf16, ref, rtol=5e-2, atol=5e-2), "bf16 mismatch vs reference"

    # bf16 output dtype (halves output HBM writeback).
    out_bo = jax.block_until_ready(
        decomposed_bilinear_apply(packed_bf16, left, right, out_dtype=jnp.bfloat16))
    assert out_bo.dtype == jnp.bfloat16
    assert jnp.allclose(out_bo.astype(jnp.float32), ref, rtol=5e-2, atol=5e-2), \
        "bf16-output mismatch vs reference"

    # right=None path (pool depends on left only; linear_b / right term skipped).
    ref_nr = reference_forward(left, w_a, w_b, None, w_o, lin_a, None, bias)
    out_nr = jax.block_until_ready(decomposed_bilinear_apply(packed_f32, left, None))
    assert jnp.allclose(out_nr, ref_nr, rtol=1e-4, atol=1e-4), "right=None mismatch"

    # Multi-step grid: tn=8 -> 2 batch tiles of 8 rows, no activation padding needed.
    out_g = jax.block_until_ready(decomposed_bilinear_apply(packed_f32, left, right, tn=8))
    assert jnp.allclose(out_g, ref, rtol=1e-4, atol=1e-4), "multi-tile mismatch"

    # Ragged row count (N=10, not a multiple of 8 -> single full-extent block, no pad).
    left_r, right_r = left[:, :5, :], right[:, :5, :]
    ref_r = reference_forward(left_r, w_a, w_b, right_r, w_o, lin_a, lin_b, bias)
    out_r = jax.block_until_ready(decomposed_bilinear_apply(packed_f32, left_r, right_r))
    assert jnp.allclose(out_r, ref_r, rtol=1e-4, atol=1e-4), "ragged-batch mismatch"

    # Default module config: rank=1, pool_size == out_size -> w_o None, no linear/bias.
    # Exercises the specialized path that skips the rank-sum/w_o matmul entirely.
    w_a2 = uinit(jax.random.fold_in(key, 1), (out_size, 1, left_size), left_size)
    w_b2 = uinit(jax.random.fold_in(key, 2), (out_size, 1, right_size), right_size)
    packed_def = pack_decomposed_bilinear(w_a2, w_b2, compute_dtype=jnp.float32)
    assert packed_def["skip_m"]
    ref_d = reference_forward(left, w_a2, w_b2, right)
    out_d = jax.block_until_ready(decomposed_bilinear_apply(packed_def, left, right))
    assert jnp.allclose(out_d, ref_d, rtol=1e-4, atol=1e-4), "default-config mismatch"

    print("KERNEL_OK")
</pallas_src>

<mosaic_0001>
module attributes {stable_mosaic.version = 11 : i64} {
  func.func @_bilinear_kernel(%arg0: i32, %arg1: memref<16x32xf32, #tpu.memory_space<vmem>>, %arg2: memref<16x16xf32, #tpu.memory_space<vmem>>, %arg3: memref<32x256xf32, #tpu.memory_space<vmem>>, %arg4: memref<16x256xf32, #tpu.memory_space<vmem>>, %arg5: memref<128x128xf32, #tpu.memory_space<vmem>>, %arg6: memref<1x128xf32, #tpu.memory_space<vmem>>, %arg7: memref<16x128xf32, #tpu.memory_space<vmem>>) attributes {dimension_semantics = [#tpu.dimension_semantics<parallel>], iteration_bounds = array<i64: 1>, scalar_prefetch = 0 : i64, scratch_operands = 0 : i64, tpu.core_type = #tpu.core_type<tc>, window_params = [{transform_indices = @transform_0, window_bounds = array<i64: 16, 32>}, {transform_indices = @transform_1, window_bounds = array<i64: 16, 16>}, {pipeline_mode = #tpu.pipeline_mode<synchronous>, transform_indices = @transform_2, window_bounds = array<i64: 32, 256>}, {pipeline_mode = #tpu.pipeline_mode<synchronous>, transform_indices = @transform_3, window_bounds = array<i64: 16, 256>}, {pipeline_mode = #tpu.pipeline_mode<synchronous>, transform_indices = @transform_4, window_bounds = array<i64: 128, 128>}, {pipeline_mode = #tpu.pipeline_mode<synchronous>, transform_indices = @transform_5, window_bounds = array<i64: 1, 128>}, {transform_indices = @transform_6, window_bounds = array<i64: 16, 128>}]} {
    %c0 = arith.constant 0 : index
    %c0_0 = arith.constant 0 : index
    %0 = vector.load %arg1[%c0, %c0_0] : memref<16x32xf32, #tpu.memory_space<vmem>>, vector<16x32xf32>
    %c0_1 = arith.constant 0 : index
    %c0_2 = arith.constant 0 : index
    %1 = vector.load %arg3[%c0_1, %c0_2] : memref<32x256xf32, #tpu.memory_space<vmem>>, vector<32x256xf32>
    %cst = arith.constant dense<0.000000e+00> : vector<16x256xf32>
    %2 = tpu.matmul %0, %1, %cst {dimension_numbers = #tpu.dot_dimension_numbers<[1], [0], [0], [1], [0, 0, 1, 1], [], []>} : vector<16x32xf32>, vector<32x256xf32>, vector<16x256xf32> -> vector<16x256xf32>
    %c0_3 = arith.constant 0 : index
    %c0_4 = arith.constant 0 : index
    %3 = vector.load %arg2[%c0_3, %c0_4] : memref<16x16xf32, #tpu.memory_space<vmem>>, vector<16x16xf32>
    %c0_5 = arith.constant 0 : index
    %c0_6 = arith.constant 0 : index
    %4 = vector.load %arg4[%c0_5, %c0_6] : memref<16x256xf32, #tpu.memory_space<vmem>>, vector<16x256xf32>
    %cst_7 = arith.constant dense<0.000000e+00> : vector<16x256xf32>
    %5 = tpu.matmul %3, %4, %cst_7 {dimension_numbers = #tpu.dot_dimension_numbers<[1], [0], [0], [1], [0, 0, 1, 1], [], []>} : vector<16x16xf32>, vector<16x256xf32>, vector<16x256xf32> -> vector<16x256xf32>
    %6 = vector.extract_strided_slice %2 {offsets = [0, 0], sizes = [16, 128], strides = [1, 1]} : vector<16x256xf32> to vector<16x128xf32>
    %7 = vector.extract_strided_slice %5 {offsets = [0, 0], sizes = [16, 128], strides = [1, 1]} : vector<16x256xf32> to vector<16x128xf32>
    %8 = arith.mulf %6, %7 : vector<16x128xf32>
    %9 = vector.extract_strided_slice %2 {offsets = [0, 128], sizes = [16, 128], strides = [1, 1]} : vector<16x256xf32> to vector<16x128xf32>
    %10 = vector.extract_strided_slice %5 {offsets = [0, 128], sizes = [16, 128], strides = [1, 1]} : vector<16x256xf32> to vector<16x128xf32>
    %11 = arith.addf %9, %10 : vector<16x128xf32>
    %c0_8 = arith.constant 0 : index
    %c0_9 = arith.constant 0 : index
    %12 = vector.load %arg5[%c0_8, %c0_9] : memref<128x128xf32, #tpu.memory_space<vmem>>, vector<128x128xf32>
    %cst_10 = arith.constant dense<0.000000e+00> : vector<16x128xf32>
    %13 = tpu.matmul %8, %12, %cst_10 {dimension_numbers = #tpu.dot_dimension_numbers<[1], [0], [0], [1], [0, 0, 1, 1], [], []>} : vector<16x128xf32>, vector<128x128xf32>, vector<16x128xf32> -> vector<16x128xf32>
    %14 = arith.addf %13, %11 : vector<16x128xf32>
    %c0_11 = arith.constant 0 : index
    %c0_12 = arith.constant 0 : index
    %15 = vector.load %arg6[%c0_11, %c0_12] : memref<1x128xf32, #tpu.memory_space<vmem>>, vector<1x128xf32>
    %16 = vector.broadcast %15 : vector<1x128xf32> to vector<16x128xf32>
    %17 = arith.addf %14, %16 : vector<16x128xf32>
    %c0_13 = arith.constant 0 : index
    %c0_14 = arith.constant 0 : index
    %18 = vector.load %arg7[%c0_13, %c0_14] : memref<16x128xf32, #tpu.memory_space<vmem>>, vector<16x128xf32>
    tpu.vector_store %arg7[%c0_13, %c0_14], %17 {strides = array<i32>} : memref<16x128xf32, #tpu.memory_space<vmem>>, vector<16x128xf32>,
    return
  }
  func.func @transform_0(%arg0: i32) -> (i32, i32) {
    %c0_i32 = arith.constant 0 : i32
    %c0_i32_0 = arith.constant 0 : i32
    return %arg0, %c0_i32 : i32, i32
  }
  func.func @transform_1(%arg0: i32) -> (i32, i32) {
    %c0_i32 = arith.constant 0 : i32
    %c0_i32_0 = arith.constant 0 : i32
    return %arg0, %c0_i32 : i32, i32
  }
  func.func @transform_2(%arg0: i32) -> (i32, i32) {
    %c0_i32 = arith.constant 0 : i32
    %c0_i32_0 = arith.constant 0 : i32
    %c0_i32_1 = arith.constant 0 : i32
    return %c0_i32, %c0_i32_0 : i32, i32
  }
  func.func @transform_3(%arg0: i32) -> (i32, i32) {
    %c0_i32 = arith.constant 0 : i32
    %c0_i32_0 = arith.constant 0 : i32
    %c0_i32_1 = arith.constant 0 : i32
    return %c0_i32, %c0_i32_0 : i32, i32
  }
  func.func @transform_4(%arg0: i32) -> (i32, i32) {
    %c0_i32 = arith.constant 0 : i32
    %c0_i32_0 = arith.constant 0 : i32
    %c0_i32_1 = arith.constant 0 : i32
    return %c0_i32, %c0_i32_0 : i32, i32
  }
  func.func @transform_5(%arg0: i32) -> (i32, i32) {
    %c0_i32 = arith.constant 0 : i32
    %c0_i32_0 = arith.constant 0 : i32
    %c0_i32_1 = arith.constant 0 : i32
    return %c0_i32, %c0_i32_0 : i32, i32
  }
  func.func @transform_6(%arg0: i32) -> (i32, i32) {
    %c0_i32 = arith.constant 0 : i32
    %c0_i32_0 = arith.constant 0 : i32
    return %arg0, %c0_i32 : i32, i32
  }
}

module attributes {stable_mosaic.version = 11 : i64} {
  func.func @_bilinear_kernel(%arg0: i32, %arg1: memref<16x32xf32, #tpu.memory_space<vmem>>, %arg2: memref<16x16xf32, #tpu.memory_space<vmem>>, %arg3: memref<32x256xf32, #tpu.memory_space<vmem>>, %arg4: memref<16x256xf32, #tpu.memory_space<vmem>>, %arg5: memref<128x128xf32, #tpu.memory_space<vmem>>, %arg6: memref<1x128xf32, #tpu.memory_space<vmem>>, %arg7: memref<16x128xf32, #tpu.memory_space<vmem>>) attributes {dimension_semantics = [#tpu.dimension_semantics<parallel>], iteration_bounds = array<i64: 1>, scalar_prefetch = 0 : i64, scratch_operands = 0 : i64, tpu.core_type = #tpu.core_type<tc>, window_params = [{transform_indices = @transform_0, window_bounds = array<i64: 16, 32>}, {transform_indices = @transform_1, window_bounds = array<i64: 16, 16>}, {pipeline_mode = #tpu.pipeline_mode<synchronous>, transform_indices = @transform_2, window_bounds = array<i64: 32, 256>}, {pipeline_mode = #tpu.pipeline_mode<synchronous>, transform_indices = @transform_3, window_bounds = array<i64: 16, 256>}, {pipeline_mode = #tpu.pipeline_mode<synchronous>, transform_indices = @transform_4, window_bounds = array<i64: 128, 128>}, {pipeline_mode = #tpu.pipeline_mode<synchronous>, transform_indices = @transform_5, window_bounds = array<i64: 1, 128>}, {transform_indices = @transform_6, window_bounds = array<i64: 16, 128>}]} {
    %c0 = arith.constant 0 : index
    %c0_0 = arith.constant 0 : index
    %0 = vector.load %arg1[%c0, %c0_0] : memref<16x32xf32, #tpu.memory_space<vmem>>, vector<16x32xf32>
    %c0_1 = arith.constant 0 : index
    %c0_2 = arith.constant 0 : index
    %1 = vector.load %arg3[%c0_1, %c0_2] : memref<32x256xf32, #tpu.memory_space<vmem>>, vector<32x256xf32>
    %cst = arith.constant dense<0.000000e+00> : vector<16x256xf32>
    %2 = tpu.matmul %0, %1, %cst {dimension_numbers = #tpu.dot_dimension_numbers<[1], [0], [0], [1], [0, 0, 1, 1], [], []>} : vector<16x32xf32>, vector<32x256xf32>, vector<16x256xf32> -> vector<16x256xf32>
    %c0_3 = arith.constant 0 : index
    %c0_4 = arith.constant 0 : index
    %3 = vector.load %arg2[%c0_3, %c0_4] : memref<16x16xf32, #tpu.memory_space<vmem>>, vector<16x16xf32>
    %c0_5 = arith.constant 0 : index
    %c0_6 = arith.constant 0 : index
    %4 = vector.load %arg4[%c0_5, %c0_6] : memref<16x256xf32, #tpu.memory_space<vmem>>, vector<16x256xf32>
    %cst_7 = arith.constant dense<0.000000e+00> : vector<16x256xf32>
    %5 = tpu.matmul %3, %4, %cst_7 {dimension_numbers = #tpu.dot_dimension_numbers<[1], [0], [0], [1], [0, 0, 1, 1], [], []>} : vector<16x16xf32>, vector<16x256xf32>, vector<16x256xf32> -> vector<16x256xf32>
    %6 = vector.extract_strided_slice %2 {offsets = [0, 0], sizes = [16, 128], strides = [1, 1]} : vector<16x256xf32> to vector<16x128xf32>
    %7 = vector.extract_strided_slice %5 {offsets = [0, 0], sizes = [16, 128], strides = [1, 1]} : vector<16x256xf32> to vector<16x128xf32>
    %8 = arith.mulf %6, %7 : vector<16x128xf32>
    %9 = vector.extract_strided_slice %2 {offsets = [0, 128], sizes = [16, 128], strides = [1, 1]} : vector<16x256xf32> to vector<16x128xf32>
    %10 = vector.extract_strided_slice %5 {offsets = [0, 128], sizes = [16, 128], strides = [1, 1]} : vector<16x256xf32> to vector<16x128xf32>
    %11 = arith.addf %9, %10 : vector<16x128xf32>
    %c0_8 = arith.constant 0 : index
    %c0_9 = arith.constant 0 : index
    %12 = vector.load %arg5[%c0_8, %c0_9] : memref<128x128xf32, #tpu.memory_space<vmem>>, vector<128x128xf32>
    %cst_10 = arith.constant dense<0.000000e+00> : vector<16x128xf32>
    %13 = tpu.matmul %8, %12, %cst_10 {dimension_numbers = #tpu.dot_dimension_numbers<[1], [0], [0], [1], [0, 0, 1, 1], [], []>} : vector<16x128xf32>, vector<128x128xf32>, vector<16x128xf32> -> vector<16x128xf32>
    %14 = arith.addf %13, %11 : vector<16x128xf32>
    %c0_11 = arith.constant 0 : index
    %c0_12 = arith.constant 0 : index
    %15 = vector.load %arg6[%c0_11, %c0_12] : memref<1x128xf32, #tpu.memory_space<vmem>>, vector<1x128xf32>
    %16 = vector.broadcast %15 : vector<1x128xf32> to vector<16x128xf32>
    %17 = arith.addf %14, %16 : vector<16x128xf32>
    %c0_13 = arith.constant 0 : index
    %c0_14 = arith.constant 0 : index
    %18 = vector.load %arg7[%c0_13, %c0_14] : memref<16x128xf32, #tpu.memory_space<vmem>>, vector<16x128xf32>
    tpu.vector_store %arg7[%c0_13, %c0_14], %17 {strides = array<i32>} : memref<16x128xf32, #tpu.memory_space<vmem>>, vector<16x128xf32>,
    return
  }
  func.func @transform_0(%arg0: i32) -> (i32, i32) {
    %c0_i32 = arith.constant 0 : i32
    %c0_i32_0 = arith.constant 0 : i32
    return %arg0, %c0_i32 : i32, i32
  }
  func.func @transform_1(%arg0: i32) -> (i32, i32) {
    %c0_i32 = arith.constant 0 : i32
    %c0_i32_0 = arith.constant 0 : i32
    return %arg0, %c0_i32 : i32, i32
  }
  func.func @transform_2(%arg0: i32) -> (i32, i32) {
    %c0_i32 = arith.constant 0 : i32
    %c0_i32_0 = arith.constant 0 : i32
    %c0_i32_1 = arith.constant 0 : i32
    return %c0_i32, %c0_i32_0 : i32, i32
  }
  func.func @transform_3(%arg0: i32) -> (i32, i32) {
    %c0_i32 = arith.constant 0 : i32
    %c0_i32_0 = arith.constant 0 : i32
    %c0_i32_1 = arith.constant 0 : i32
    return %c0_i32, %c0_i32_0 : i32, i32
  }
  func.func @transform_4(%arg0: i32) -> (i32, i32) {
    %c0_i32 = arith.constant 0 : i32
    %c0_i32_0 = arith.constant 0 : i32
    %c0_i32_1 = arith.constant 0 : i32
    return %c0_i32, %c0_i32_0 : i32, i32
  }
  func.func @transform_5(%arg0: i32) -> (i32, i32) {
    %c0_i32 = arith.constant 0 : i32
    %c0_i32_0 = arith.constant 0 : i32
    %c0_i32_1 = arith.constant 0 : i32
    return %c0_i32, %c0_i32_0 : i32, i32
  }
  func.func @transform_6(%arg0: i32) -> (i32, i32) {
    %c0_i32 = arith.constant 0 : i32
    %c0_i32_0 = arith.constant 0 : i32
    return %arg0, %c0_i32 : i32, i32
  }
}

</mosaic_0001>

<llo_original>
// kernel: tpu_custom_call.1
$region0: #{tpu_custom_call.1}
  #allocation0 [shape = 'u32[]', space=smem, size = 0x4, offset = 0x4, fixed_abs, tag = 'smem constant byte address 0x4 - core index']
  #allocation1 [shape = 'u32[144,128]{1,0:T(1,128)}', space=vmem, size = 0x12000, scoped, tag = 'internal scratch']
  %s0 = inlined_call_operand.hbm [shape: f32[16,32], index: 0, kind: input, shape index: {}]
  %s1 = inlined_call_operand.hbm [shape: f32[16,16], index: 1, kind: input, shape index: {}]
  %s2 = inlined_call_operand.hbm [shape: f32[32,256], index: 2, kind: input, shape index: {}]
  %s3 = inlined_call_operand.hbm [shape: f32[16,256], index: 3, kind: input, shape index: {}]
  %s4 = inlined_call_operand.hbm [shape: f32[128,128], index: 4, kind: input, shape index: {}]
  %s5 = inlined_call_operand.vmem [shape: f32[1,128], index: 5, kind: input, shape index: {}]
  %s6 = inlined_call_operand.hbm [shape: f32[16,128], index: 6, kind: output, shape index: {}]
  %s7 = sld [smem:[#allocation0]]
  $region54: #{tpu_custom_call.1} parent=0
    _
  %s9 = ssub.s32 1, %s7
  %s10 = scalar_select 0, %s9, %s7
  $region1: #{tpu_custom_call.1} parent=0
    #allocation2 [shape = 'u8[8192]{0}', space=vmem, size = 0x2000, scoped, tag = 'input window, operand 0, single buffered']
    #allocation3 [shape = 's32[1]{0}', space=sflag, size = 0x4, scoped, tag = 'scoped memory for tpu_custom_call.1']
    #allocation4 [shape = 's32[1]{0}', space=sflag, size = 0x4, scoped, tag = 'scoped memory for tpu_custom_call.1']
    #allocation5 [shape = 'u8[8192]{0}', space=vmem, size = 0x2000, scoped, tag = 'input window, operand 1, single buffered']
    #allocation6 [shape = 's32[1]{0}', space=sflag, size = 0x4, scoped, tag = 'scoped memory for tpu_custom_call.1']
    #allocation7 [shape = 'u8[32768]{0}', space=vmem, size = 0x8000, scoped, tag = 'input window, operand 2, single buffered']
    #allocation8 [shape = 'u8[16384]{0}', space=vmem, size = 0x4000, scoped, tag = 'input window, operand 3, single buffered']
    #allocation9 [shape = 's32[1]{0}', space=sflag, size = 0x4, scoped, tag = 'scoped memory for tpu_custom_call.1']
    #allocation10 [shape = 'u8[65536]{0}', space=vmem, size = 0x10000, scoped, tag = 'input window, operand 4, single buffered']
    #allocation11 [shape = 'u8[8192]{0}', space=vmem, size = 0x2000, scoped, tag = 'output window, operand 0, single buffered']
    %11 = vsyncpa [#allocation3], 0
    %12 = vsyncpa [#allocation6], 0
    %13 = vsyncpa [#allocation9], 0
    %14 = vsyncpa [#allocation4], 0
    // Predicated region
    $region2: #{tpu_custom_call.1} parent=1 // pred_check
      _
    $region3: #{tpu_custom_call.1} parent=1 // pred_check_branch
      %16 = sbr.rel (0) target = $region5
    $region4: #{tpu_custom_call.1} parent=1 // pred_region
      %s18 = ssub.s32 256, 256
      %19 = vsyncadd [#allocation3], %s18
      %s20 = sshll.u32 [#allocation2], 4
      %s21 = int_to_ptr.vmem [resolvable:$true] %s20
      %26 = dma.hbm_to_vmem [thread:$0]  %s0, 256, %s21, [#allocation3], 128, 128, 8
    $region5: #{tpu_custom_call.1} parent=1 // pred_fallthru
      _
    // Predicated region
    $region6: #{tpu_custom_call.1} parent=1 // pred_check
      _
    $region7: #{tpu_custom_call.1} parent=1 // pred_check_branch
      %28 = sbr.rel (0) target = $region9
    $region8: #{tpu_custom_call.1} parent=1 // pred_region
      %s30 = ssub.s32 256, 256
      %31 = vsyncadd [#allocation6], %s30
      %s32 = sshll.u32 [#allocation5], 4
      %s33 = int_to_ptr.vmem [resolvable:$true] %s32
      %38 = dma.hbm_to_vmem [thread:$0]  %s1, 256, %s33, [#allocation6], 128, 128, 8
    $region9: #{tpu_custom_call.1} parent=1 // pred_fallthru
      _
    // Predicated region
    $region10: #{tpu_custom_call.1} parent=1 // pred_check
      _
    $region11: #{tpu_custom_call.1} parent=1 // pred_check_branch
      %40 = sbr.rel (0) target = $region13
    $region12: #{tpu_custom_call.1} parent=1 // pred_region
      %s42 = ssub.s32 1024, 1024
      %43 = vsyncadd [#allocation6], %s42
      %s44 = sshll.u32 [#allocation7], 4
      %s45 = int_to_ptr.vmem [resolvable:$true] %s44
      %50 = dma.hbm_to_vmem [thread:$0]  %s2, 1024, %s45, [#allocation6], 256, 256, 16
    $region13: #{tpu_custom_call.1} parent=1 // pred_fallthru
      _
    // Predicated region
    $region14: #{tpu_custom_call.1} parent=1 // pred_check
      _
    $region15: #{tpu_custom_call.1} parent=1 // pred_check_branch
      %52 = sbr.rel (0) target = $region17
    $region16: #{tpu_custom_call.1} parent=1 // pred_region
      %s54 = ssub.s32 512, 512
      %55 = vsyncadd [#allocation9], %s54
      %s56 = sshll.u32 [#allocation8], 4
      %s57 = int_to_ptr.vmem [resolvable:$true] %s56
      %62 = dma.hbm_to_vmem [thread:$0]  %s3, 512, %s57, [#allocation9], 256, 256, 16
    $region17: #{tpu_custom_call.1} parent=1 // pred_fallthru
      _
    // Predicated region
    $region18: #{tpu_custom_call.1} parent=1 // pred_check
      _
    $region19: #{tpu_custom_call.1} parent=1 // pred_check_branch
      %64 = sbr.rel (0) target = $region21
    $region20: #{tpu_custom_call.1} parent=1 // pred_region
      %s66 = ssub.s32 2048, 2048
      %67 = vsyncadd [#allocation9], %s66
      %s68 = sshll.u32 [#allocation10], 4
      %s69 = int_to_ptr.vmem [resolvable:$true] %s68
      %74 = dma.hbm_to_vmem [thread:$0]  %s4, 2048, %s69, [#allocation9], 128, 128, 8
    $region21: #{tpu_custom_call.1} parent=1 // pred_fallthru
      _
    // Predicated region
    $region22: #{tpu_custom_call.1} parent=1 // pred_check
      _
    $region23: #{tpu_custom_call.1} parent=1 // pred_check_branch
      %76 = sbr.rel (0) target = $region25
    $region24: #{tpu_custom_call.1} parent=1 // pred_region
      _
    $region25: #{tpu_custom_call.1} parent=1 // pred_fallthru
      _
    // Predicated region
    $region26: #{tpu_custom_call.1} parent=1 // pred_check
      _
    $region27: #{tpu_custom_call.1} parent=1 // pred_check_branch
      %78 = sbr.rel (0) target = $region29
    $region28: #{tpu_custom_call.1} parent=1 // pred_region
      %79 = dma.done [#allocation3], 256
    $region29: #{tpu_custom_call.1} parent=1 // pred_fallthru
      _
    // Predicated region
    $region30: #{tpu_custom_call.1} parent=1 // pred_check
      _
    $region31: #{tpu_custom_call.1} parent=1 // pred_check_branch
      %81 = sbr.rel (0) target = $region33
    $region32: #{tpu_custom_call.1} parent=1 // pred_region
      %82 = dma.done [#allocation6], 256
    $region33: #{tpu_custom_call.1} parent=1 // pred_fallthru
      _
    // Predicated region
    $region34: #{tpu_custom_call.1} parent=1 // pred_check
      _
    $region35: #{tpu_custom_call.1} parent=1 // pred_check_branch
      %84 = sbr.rel (0) target = $region37
    $region36: #{tpu_custom_call.1} parent=1 // pred_region
      %85 = dma.done [#allocation6], 1024
    $region37: #{tpu_custom_call.1} parent=1 // pred_fallthru
      _
    // Predicated region
    $region38: #{tpu_custom_call.1} parent=1 // pred_check
      _
    $region39: #{tpu_custom_call.1} parent=1 // pred_check_branch
      %87 = sbr.rel (0) target = $region41
    $region40: #{tpu_custom_call.1} parent=1 // pred_region
      %88 = dma.done [#allocation9], 512
    $region41: #{tpu_custom_call.1} parent=1 // pred_fallthru
      _
    // Predicated region
    $region42: #{tpu_custom_call.1} parent=1 // pred_check
      _
    $region43: #{tpu_custom_call.1} parent=1 // pred_check_branch
      %90 = sbr.rel (0) target = $region45
    $region44: #{tpu_custom_call.1} parent=1 // pred_region
      %91 = dma.done [#allocation9], 2048
    $region45: #{tpu_custom_call.1} parent=1 // pred_fallthru
      _
    %v92 = vld [vmem:[#allocation2] sm:$0xff]
    %v93 = vld [vmem:[#allocation2 + $0x8] sm:$0xff]
    %v94 = vld [vmem:[#allocation7] sm:$0xff]
    %v95 = vld [vmem:[#allocation7 + $0x8] sm:$0xff]
    %v96 = vld [vmem:[#allocation7 + $0x10] sm:$0xff]
    %v97 = vld [vmem:[#allocation7 + $0x18] sm:$0xff]
    %v98 = vld [vmem:[#allocation7 + $0x20] sm:$0xff]
    %v99 = vld [vmem:[#allocation7 + $0x28] sm:$0xff]
    %v100 = vld [vmem:[#allocation7 + $0x30] sm:$0xff]
    %v101 = vld [vmem:[#allocation7 + $0x38] sm:$0xff]
    %vm102 = vcmask 261120
    %v104 = vsel %vm102, %v92, 0
    %v107 = vsel %vm102, %v93, 0
    %109 = vmatprep.subr.mxu0 %v95
    %110 = vmatpush1.msra.mxu0 %v94
    %111 = vmatprep.subr.mxu0 %v97
    %112 = vmatpush1.msra.mxu0 %v96
    %113 = vmatprep.subr.mxu0 %v99
    %114 = vmatpush1.msra.mxu0 %v98
    %115 = vmatprep.subr.mxu0 %v101
    %116 = vmatpush1.msra.mxu0 %v100
    %117 = vmatprep.subr.mxu0 0.0
    %118 = vmatpush1.msra.mxu0 0.0
    %119 = vmatprep.subr.mxu0 0.0
    %120 = vmatpush1.msra.mxu0 0.0
    %121 = vmatprep.subr.mxu0 0.0
    %122 = vmatpush1.msra.mxu0 0.0
    %123 = vmatprep.subr.mxu0 0.0
    %124 = vmatpush1.msra.mxu0 0.0
    %125 = vmatprep.subr.mxu0 0.0
    %126 = vmatpush1.msra.mxu0 0.0
    %127 = vmatprep.subr.mxu0 0.0
    %128 = vmatpush1.msra.mxu0 0.0
    %129 = vmatprep.subr.mxu0 0.0
    %130 = vmatpush1.msra.mxu0 0.0
    %131 = vmatprep.subr.mxu0 0.0
    %132 = vmatpush1.msra.mxu0 0.0
    %133 = vmatprep.subr.mxu0 0.0
    %134 = vmatpush1.msra.mxu0 0.0
    %135 = vmatprep.subr.mxu0 0.0
    %136 = vmatpush1.msra.mxu0 0.0
    %137 = vmatprep.subr.mxu0 0.0
    %138 = vmatpush1.msra.mxu0 0.0
    %139 = vmatprep.subr.mxu0 0.0
    %140 = vmatpush1.msra.mxu0 0.0
    %141 = vmatprep.subr.mxu0 0.0
    %142 = vmatpush1.msra.mxu0 0.0
    %143 = vmatprep.subr.mxu0 0.0
    %144 = vmatpush1.msra.mxu0 0.0
    %145 = vmatprep.subr.mxu0 0.0
    %146 = vmatpush1.msra.mxu0 0.0
    %147 = vmatprep.subr.mxu0 0.0
    %148 = vmatpush1.msra.mxu0 0.0
    %149 = vmatprep.subr.mxu0 0.0
    %150 = vmatpush1.msra.mxu0 0.0
    %151 = vmatprep.subr.mxu0 0.0
    %152 = vmatpush1.msra.mxu0 0.0
    %153 = vmatprep.subr.mxu0 0.0
    %154 = vmatpush1.msra.mxu0 0.0
    %155 = vmatprep.subr.mxu0 0.0
    %156 = vmatpush1.msra.mxu0 0.0
    %157 = vmatprep.subr.mxu0 0.0
    %158 = vmatpush1.msra.mxu0 0.0
    %159 = vmatprep.subr.mxu0 0.0
    %160 = vmatpush1.msra.mxu0 0.0
    %161 = vmatprep.subr.mxu0 0.0
    %162 = vmatpush1.msra.mxu0 0.0
    %163 = vmatprep.subr.mxu0 0.0
    %164 = vmatpush1.msra.mxu0 0.0
    %165 = vmatprep.subr.mxu0 0.0
    %166 = vmatpush1.msra.mxu0 0.0
    %167 = vmatprep.subr.mxu0 0.0
    %168 = vmatpush1.msra.mxu0 0.0
    %169 = vmatprep.subr.mxu0 0.0
    %170 = vmatpush1.msra.mxu0 0.0
    %171 = vmatprep.subr.mxu0 0.0
    %172 = vmatpush1.msra.mxu0 0.0
    %173 = vmatprep.mubr.f32.mxu0 0.0
    %174 = vmatmul.mubr.f32.gmra.mrb[0].mxu0 %v104
    %v175 = vpop.f32.mrb[0].mxu0
    %v176 = vadd.f32 0.0, %v175
    %v177 = vpop.f32.mrb[0].mxu0
    %v178 = vadd.f32 0.0, %v177
    %179 = vmatprep.mubr.f32.mxu0 0.0
    %180 = vmatmul.mubr.f32.gmra.mrb[0].mxu0 %v107
    %v181 = vpop.f32.mrb[0].mxu0
    %v182 = vadd.f32 0.0, %v181
    %v183 = vpop.f32.mrb[0].mxu0
    %v184 = vadd.f32 0.0, %v183
    %185 = vdwg.mxu0
    %v186 = vld [vmem:[#allocation5] sm:$0xff]
    %v187 = vld [vmem:[#allocation5 + $0x8] sm:$0xff]
    %v188 = vld [vmem:[#allocation8] sm:$0xff]
    %v189 = vld [vmem:[#allocation8 + $0x8] sm:$0xff]
    %v190 = vld [vmem:[#allocation8 + $0x10] sm:$0xff]
    %v191 = vld [vmem:[#allocation8 + $0x18] sm:$0xff]
    %vm192 = vcmask 130048
    %v194 = vsel %vm192, %v186, 0
    %v197 = vsel %vm192, %v187, 0
    %199 = vmatprep.subr.mxu0 %v189
    %200 = vmatpush1.msra.mxu0 %v188
    %201 = vmatprep.subr.mxu0 %v191
    %202 = vmatpush1.msra.mxu0 %v190
    %203 = vmatprep.subr.mxu0 0.0
    %204 = vmatpush1.msra.mxu0 0.0
    %205 = vmatprep.subr.mxu0 0.0
    %206 = vmatpush1.msra.mxu0 0.0
    %207 = vmatprep.subr.mxu0 0.0
    %208 = vmatpush1.msra.mxu0 0.0
    %209 = vmatprep.subr.mxu0 0.0
    %210 = vmatpush1.msra.mxu0 0.0
    %211 = vmatprep.subr.mxu0 0.0
    %212 = vmatpush1.msra.mxu0 0.0
    %213 = vmatprep.subr.mxu0 0.0
    %214 = vmatpush1.msra.mxu0 0.0
    %215 = vmatprep.subr.mxu0 0.0
    %216 = vmatpush1.msra.mxu0 0.0
    %217 = vmatprep.subr.mxu0 0.0
    %218 = vmatpush1.msra.mxu0 0.0
    %219 = vmatprep.subr.mxu0 0.0
    %220 = vmatpush1.msra.mxu0 0.0
    %221 = vmatprep.subr.mxu0 0.0
    %222 = vmatpush1.msra.mxu0 0.0
    %223 = vmatprep.subr.mxu0 0.0
    %224 = vmatpush1.msra.mxu0 0.0
    %225 = vmatprep.subr.mxu0 0.0
    %226 = vmatpush1.msra.mxu0 0.0
    %227 = vmatprep.subr.mxu0 0.0
    %228 = vmatpush1.msra.mxu0 0.0
    %229 = vmatprep.subr.mxu0 0.0
    %230 = vmatpush1.msra.mxu0 0.0
    %231 = vmatprep.subr.mxu0 0.0
    %232 = vmatpush1.msra.mxu0 0.0
    %233 = vmatprep.subr.mxu0 0.0
    %234 = vmatpush1.msra.mxu0 0.0
    %235 = vmatprep.subr.mxu0 0.0
    %236 = vmatpush1.msra.mxu0 0.0
    %237 = vmatprep.subr.mxu0 0.0
    %238 = vmatpush1.msra.mxu0 0.0
    %239 = vmatprep.subr.mxu0 0.0
    %240 = vmatpush1.msra.mxu0 0.0
    %241 = vmatprep.subr.mxu0 0.0
    %242 = vmatpush1.msra.mxu0 0.0
    %243 = vmatprep.subr.mxu0 0.0
    %244 = vmatpush1.msra.mxu0 0.0
    %245 = vmatprep.subr.mxu0 0.0
    %246 = vmatpush1.msra.mxu0 0.0
    %247 = vmatprep.subr.mxu0 0.0
    %248 = vmatpush1.msra.mxu0 0.0
    %249 = vmatprep.subr.mxu0 0.0
    %250 = vmatpush1.msra.mxu0 0.0
    %251 = vmatprep.subr.mxu0 0.0
    %252 = vmatpush1.msra.mxu0 0.0
    %253 = vmatprep.subr.mxu0 0.0
    %254 = vmatpush1.msra.mxu0 0.0
    %255 = vmatprep.subr.mxu0 0.0
    %256 = vmatpush1.msra.mxu0 0.0
    %257 = vmatprep.subr.mxu0 0.0
    %258 = vmatpush1.msra.mxu0 0.0
    %259 = vmatprep.subr.mxu0 0.0
    %260 = vmatpush1.msra.mxu0 0.0
    %261 = vmatprep.subr.mxu0 0.0
    %262 = vmatpush1.msra.mxu0 0.0
    %263 = vmatprep.mubr.f32.mxu0 0.0
    %264 = vmatmul.mubr.f32.gmra.mrb[0].mxu0 %v194
    %v265 = vpop.f32.mrb[0].mxu0
    %v266 = vadd.f32 0.0, %v265
    %v267 = vpop.f32.mrb[0].mxu0
    %v268 = vadd.f32 0.0, %v267
    %269 = vmatprep.mubr.f32.mxu0 0.0
    %270 = vmatmul.mubr.f32.gmra.mrb[0].mxu0 %v197
    %v271 = vpop.f32.mrb[0].mxu0
    %v272 = vadd.f32 0.0, %v271
    %v273 = vpop.f32.mrb[0].mxu0
    %v274 = vadd.f32 0.0, %v273
    %275 = vdwg.mxu0
    %v276 = vmul.f32 %v176, %v266
    %v277 = vmul.f32 %v182, %v272
    %v278 = vadd.f32 %v178, %v268
    %v279 = vadd.f32 %v184, %v274
    %v280 = vld [vmem:[#allocation10] sm:$0xff]
    %v281 = vld [vmem:[#allocation10 + $0x8] sm:$0xff]
    %v282 = vld [vmem:[#allocation10 + $0x10] sm:$0xff]
    %v283 = vld [vmem:[#allocation10 + $0x18] sm:$0xff]
    %v284 = vld [vmem:[#allocation10 + $0x20] sm:$0xff]
    %v285 = vld [vmem:[#allocation10 + $0x28] sm:$0xff]
    %v286 = vld [vmem:[#allocation10 + $0x30] sm:$0xff]
    %v287 = vld [vmem:[#allocation10 + $0x38] sm:$0xff]
    %v288 = vld [vmem:[#allocation10 + $0x40] sm:$0xff]
    %v289 = vld [vmem:[#allocation10 + $0x48] sm:$0xff]
    %v290 = vld [vmem:[#allocation10 + $0x50] sm:$0xff]
    %v291 = vld [vmem:[#allocation10 + $0x58] sm:$0xff]
    %v292 = vld [vmem:[#allocation10 + $0x60] sm:$0xff]
    %v293 = vld [vmem:[#allocation10 + $0x68] sm:$0xff]
    %v294 = vld [vmem:[#allocation10 + $0x70] sm:$0xff]
    %v295 = vld [vmem:[#allocation10 + $0x78] sm:$0xff]
    %296 = vmatprep.subr.mxu0 0.0
    %297 = vmatpush1.msra.mxu0 %v280
    %298 = vmatprep.subr.mxu0 0.0
    %299 = vmatpush1.msra.mxu0 %v281
    %300 = vmatprep.subr.mxu0 0.0
    %301 = vmatpush1.msra.mxu0 %v282
    %302 = vmatprep.subr.mxu0 0.0
    %303 = vmatpush1.msra.mxu0 %v283
    %304 = vmatprep.subr.mxu0 0.0
    %305 = vmatpush1.msra.mxu0 %v284
    %306 = vmatprep.subr.mxu0 0.0
    %307 = vmatpush1.msra.mxu0 %v285
    %308 = vmatprep.subr.mxu0 0.0
    %309 = vmatpush1.msra.mxu0 %v286
    %310 = vmatprep.subr.mxu0 0.0
    %311 = vmatpush1.msra.mxu0 %v287
    %312 = vmatprep.subr.mxu0 0.0
    %313 = vmatpush1.msra.mxu0 %v288
    %314 = vmatprep.subr.mxu0 0.0
    %315 = vmatpush1.msra.mxu0 %v289
    %316 = vmatprep.subr.mxu0 0.0
    %317 = vmatpush1.msra.mxu0 %v290
    %318 = vmatprep.subr.mxu0 0.0
    %319 = vmatpush1.msra.mxu0 %v291
    %320 = vmatprep.subr.mxu0 0.0
    %321 = vmatpush1.msra.mxu0 %v292
    %322 = vmatprep.subr.mxu0 0.0
    %323 = vmatpush1.msra.mxu0 %v293
    %324 = vmatprep.subr.mxu0 0.0
    %325 = vmatpush1.msra.mxu0 %v294
    %326 = vmatprep.subr.mxu0 0.0
    %327 = vmatpush1.msra.mxu0 %v295
    %328 = vmatprep.subr.mxu0 0.0
    %329 = vmatpush1.msra.mxu0 0.0
    %330 = vmatprep.subr.mxu0 0.0
    %331 = vmatpush1.msra.mxu0 0.0
    %332 = vmatprep.subr.mxu0 0.0
    %333 = vmatpush1.msra.mxu0 0.0
    %334 = vmatprep.subr.mxu0 0.0
    %335 = vmatpush1.msra.mxu0 0.0
    %336 = vmatprep.subr.mxu0 0.0
    %337 = vmatpush1.msra.mxu0 0.0
    %338 = vmatprep.subr.mxu0 0.0
    %339 = vmatpush1.msra.mxu0 0.0
    %340 = vmatprep.subr.mxu0 0.0
    %341 = vmatpush1.msra.mxu0 0.0
    %342 = vmatprep.subr.mxu0 0.0
    %343 = vmatpush1.msra.mxu0 0.0
    %344 = vmatprep.subr.mxu0 0.0
    %345 = vmatpush1.msra.mxu0 0.0
    %346 = vmatprep.subr.mxu0 0.0
    %347 = vmatpush1.msra.mxu0 0.0
    %348 = vmatprep.subr.mxu0 0.0
    %349 = vmatpush1.msra.mxu0 0.0
    %350 = vmatprep.subr.mxu0 0.0
    %351 = vmatpush1.msra.mxu0 0.0
    %352 = vmatprep.subr.mxu0 0.0
    %353 = vmatpush1.msra.mxu0 0.0
    %354 = vmatprep.subr.mxu0 0.0
    %355 = vmatpush1.msra.mxu0 0.0
    %356 = vmatprep.subr.mxu0 0.0
    %357 = vmatpush1.msra.mxu0 0.0
    %358 = vmatprep.subr.mxu0 0.0
    %359 = vmatpush1.msra.mxu0 0.0
    %360 = vmatprep.mubr.f32.mxu0 0.0
    %361 = vmatmul.mubr.f32.gmra.mrb[0].mxu0 %v276
    %v362 = vpop.f32.mrb[0].mxu0
    %v363 = vadd.f32 %v278, %v362
    %v364 = vpop.f32.mrb[0].mxu0
    %365 = vmatprep.mubr.f32.mxu0 0.0
    %366 = vmatmul.mubr.f32.gmra.mrb[0].mxu0 %v277
    %v367 = vpop.f32.mrb[0].mxu0
    %v368 = vadd.f32 %v279, %v367
    %v369 = vpop.f32.mrb[0].mxu0
    %370 = vdwg.mxu0
    %v371 = vld [vmem:[%s5] sm:$0x1]
    %v373 = vlaneseq
    %v374 = vshrl.u32 %v373, 7
    %v375 = vsub.s32 0, %v374
    %v376 = vrot.slane %v371, %v375
    %v378 = vadd.f32 %v363, %v376
    %v379 = vadd.f32 %v368, %v376
    %380 = vst [vmem:[#allocation11] sm:$0xff] %v378
    %381 = vst [vmem:[#allocation11 + $0x8] sm:$0xff] %v379
    // Predicated region
    $region46: #{tpu_custom_call.1} parent=1 // pred_check
      _
    $region47: #{tpu_custom_call.1} parent=1 // pred_check_branch
      %383 = sbr.rel (0) target = $region49
    $region48: #{tpu_custom_call.1} parent=1 // pred_region
      %s385 = ssub.s32 256, 256
      %386 = vsyncadd [#allocation4], %s385
      %s387 = sshll.u32 [#allocation11], 4
      %s388 = int_to_ptr.vmem [resolvable:$true] %s387
      %393 = dma.vmem_to_hbm [thread:$0]  %s388, 256, %s6, [#allocation4], 128, 128, 8
    $region49: #{tpu_custom_call.1} parent=1 // pred_fallthru
      _
    // Predicated region
    $region50: #{tpu_custom_call.1} parent=1 // pred_check
      _
    $region51: #{tpu_custom_call.1} parent=1 // pred_check_branch
      %395 = sbr.rel (0) target = $region53
    $region52: #{tpu_custom_call.1} parent=1 // pred_region
      %396 = dma.done [#allocation4], 256
    $region53: #{tpu_custom_call.1} parent=1 // pred_fallthru
      _
    %397 = vsyncpa [#allocation3], 1
    %398 = vsyncpa [#allocation6], 1
    %399 = vsyncpa [#allocation9], 1
    %400 = vsyncpa [#allocation4], 1

// kernel: tpu_custom_call.1
$region0: #{tpu_custom_call.1}
  #allocation0 [shape = 'u32[]', space=smem, size = 0x4, offset = 0x4, fixed_abs, tag = 'smem constant byte address 0x4 - core index']
  #allocation1 [shape = 'u32[144,128]{1,0:T(1,128)}', space=vmem, size = 0x12000, scoped, tag = 'internal scratch']
  %s0 = inlined_call_operand.hbm [shape: f32[16,32], index: 0, kind: input, shape index: {}]
  %s1 = inlined_call_operand.hbm [shape: f32[16,16], index: 1, kind: input, shape index: {}]
  %s2 = inlined_call_operand.hbm [shape: f32[32,256], index: 2, kind: input, shape index: {}]
  %s3 = inlined_call_operand.hbm [shape: f32[16,256], index: 3, kind: input, shape index: {}]
  %s4 = inlined_call_operand.hbm [shape: f32[128,128], index: 4, kind: input, shape index: {}]
  %s5 = inlined_call_operand.vmem [shape: f32[1,128], index: 5, kind: input, shape index: {}]
  %s6 = inlined_call_operand.hbm [shape: f32[16,128], index: 6, kind: output, shape index: {}]
  %s7 = sld [smem:[#allocation0]]
  $region54: #{tpu_custom_call.1} parent=0
    _
  %s9 = ssub.s32 1, %s7
  %s10 = scalar_select 0, %s9, %s7
  $region1: #{tpu_custom_call.1} parent=0
    #allocation2 [shape = 'u8[8192]{0}', space=vmem, size = 0x2000, scoped, tag = 'input window, operand 0, single buffered']
    #allocation3 [shape = 's32[1]{0}', space=sflag, size = 0x4, scoped, tag = 'scoped memory for tpu_custom_call.1']
    #allocation4 [shape = 's32[1]{0}', space=sflag, size = 0x4, scoped, tag = 'scoped memory for tpu_custom_call.1']
    #allocation5 [shape = 'u8[8192]{0}', space=vmem, size = 0x2000, scoped, tag = 'input window, operand 1, single buffered']
    #allocation6 [shape = 's32[1]{0}', space=sflag, size = 0x4, scoped, tag = 'scoped memory for tpu_custom_call.1']
    #allocation7 [shape = 'u8[32768]{0}', space=vmem, size = 0x8000, scoped, tag = 'input window, operand 2, single buffered']
    #allocation8 [shape = 'u8[16384]{0}', space=vmem, size = 0x4000, scoped, tag = 'input window, operand 3, single buffered']
    #allocation9 [shape = 's32[1]{0}', space=sflag, size = 0x4, scoped, tag = 'scoped memory for tpu_custom_call.1']
    #allocation10 [shape = 'u8[65536]{0}', space=vmem, size = 0x10000, scoped, tag = 'input window, operand 4, single buffered']
    #allocation11 [shape = 'u8[8192]{0}', space=vmem, size = 0x2000, scoped, tag = 'output window, operand 0, single buffered']
    %11 = vsyncpa [#allocation3], 0
    %12 = vsyncpa [#allocation6], 0
    %13 = vsyncpa [#allocation9], 0
    %14 = vsyncpa [#allocation4], 0
    // Predicated region
    $region2: #{tpu_custom_call.1} parent=1 // pred_check
      _
    $region3: #{tpu_custom_call.1} parent=1 // pred_check_branch
      %16 = sbr.rel (0) target = $region5
    $region4: #{tpu_custom_call.1} parent=1 // pred_region
      %s18 = ssub.s32 256, 256
      %19 = vsyncadd [#allocation3], %s18
      %s20 = sshll.u32 [#allocation2], 4
      %s21 = int_to_ptr.vmem [resolvable:$true] %s20
      %26 = dma.hbm_to_vmem [thread:$0]  %s0, 256, %s21, [#allocation3], 128, 128, 8
    $region5: #{tpu_custom_call.1} parent=1 // pred_fallthru
      _
    // Predicated region
    $region6: #{tpu_custom_call.1} parent=1 // pred_check
      _
    $region7: #{tpu_custom_call.1} parent=1 // pred_check_branch
      %28 = sbr.rel (0) target = $region9
    $region8: #{tpu_custom_call.1} parent=1 // pred_region
      %s30 = ssub.s32 256, 256
      %31 = vsyncadd [#allocation6], %s30
      %s32 = sshll.u32 [#allocation5], 4
      %s33 = int_to_ptr.vmem [resolvable:$true] %s32
      %38 = dma.hbm_to_vmem [thread:$0]  %s1, 256, %s33, [#allocation6], 128, 128, 8
    $region9: #{tpu_custom_call.1} parent=1 // pred_fallthru
      _
    // Predicated region
    $region10: #{tpu_custom_call.1} parent=1 // pred_check
      _
    $region11: #{tpu_custom_call.1} parent=1 // pred_check_branch
      %40 = sbr.rel (0) target = $region13
    $region12: #{tpu_custom_call.1} parent=1 // pred_region
      %s42 = ssub.s32 1024, 1024
      %43 = vsyncadd [#allocation6], %s42
      %s44 = sshll.u32 [#allocation7], 4
      %s45 = int_to_ptr.vmem [resolvable:$true] %s44
      %50 = dma.hbm_to_vmem [thread:$0]  %s2, 1024, %s45, [#allocation6], 256, 256, 16
    $region13: #{tpu_custom_call.1} parent=1 // pred_fallthru
      _
    // Predicated region
    $region14: #{tpu_custom_call.1} parent=1 // pred_check
      _
    $region15: #{tpu_custom_call.1} parent=1 // pred_check_branch
      %52 = sbr.rel (0) target = $region17
    $region16: #{tpu_custom_call.1} parent=1 // pred_region
      %s54 = ssub.s32 512, 512
      %55 = vsyncadd [#allocation9], %s54
      %s56 = sshll.u32 [#allocation8], 4
      %s57 = int_to_ptr.vmem [resolvable:$true] %s56
      %62 = dma.hbm_to_vmem [thread:$0]  %s3, 512, %s57, [#allocation9], 256, 256, 16
    $region17: #{tpu_custom_call.1} parent=1 // pred_fallthru
      _
    // Predicated region
    $region18: #{tpu_custom_call.1} parent=1 // pred_check
      _
    $region19: #{tpu_custom_call.1} parent=1 // pred_check_branch
      %64 = sbr.rel (0) target = $region21
    $region20: #{tpu_custom_call.1} parent=1 // pred_region
      %s66 = ssub.s32 2048, 2048
      %67 = vsyncadd [#allocation9], %s66
      %s68 = sshll.u32 [#allocation10], 4
      %s69 = int_to_ptr.vmem [resolvable:$true] %s68
      %74 = dma.hbm_to_vmem [thread:$0]  %s4, 2048, %s69, [#allocation9], 128, 128, 8
    $region21: #{tpu_custom_call.1} parent=1 // pred_fallthru
      _
    // Predicated region
    $region22: #{tpu_custom_call.1} parent=1 // pred_check
      _
    $region23: #{tpu_custom_call.1} parent=1 // pred_check_branch
      %76 = sbr.rel (0) target = $region25
    $region24: #{tpu_custom_call.1} parent=1 // pred_region
      _
    $region25: #{tpu_custom_call.1} parent=1 // pred_fallthru
      _
    // Predicated region
    $region26: #{tpu_custom_call.1} parent=1 // pred_check
      _
    $region27: #{tpu_custom_call.1} parent=1 // pred_check_branch
      %78 = sbr.rel (0) target = $region29
    $region28: #{tpu_custom_call.1} parent=1 // pred_region
      %79 = dma.done [#allocation3], 256
    $region29: #{tpu_custom_call.1} parent=1 // pred_fallthru
      _
    // Predicated region
    $region30: #{tpu_custom_call.1} parent=1 // pred_check
      _
    $region31: #{tpu_custom_call.1} parent=1 // pred_check_branch
      %81 = sbr.rel (0) target = $region33
    $region32: #{tpu_custom_call.1} parent=1 // pred_region
      %82 = dma.done [#allocation6], 256
    $region33: #{tpu_custom_call.1} parent=1 // pred_fallthru
      _
    // Predicated region
    $region34: #{tpu_custom_call.1} parent=1 // pred_check
      _
    $region35: #{tpu_custom_call.1} parent=1 // pred_check_branch
      %84 = sbr.rel (0) target = $region37
    $region36: #{tpu_custom_call.1} parent=1 // pred_region
      %85 = dma.done [#allocation6], 1024
    $region37: #{tpu_custom_call.1} parent=1 // pred_fallthru
      _
    // Predicated region
    $region38: #{tpu_custom_call.1} parent=1 // pred_check
      _
    $region39: #{tpu_custom_call.1} parent=1 // pred_check_branch
      %87 = sbr.rel (0) target = $region41
    $region40: #{tpu_custom_call.1} parent=1 // pred_region
      %88 = dma.done [#allocation9], 512
    $region41: #{tpu_custom_call.1} parent=1 // pred_fallthru
      _
    // Predicated region
    $region42: #{tpu_custom_call.1} parent=1 // pred_check
      _
    $region43: #{tpu_custom_call.1} parent=1 // pred_check_branch
      %90 = sbr.rel (0) target = $region45
    $region44: #{tpu_custom_call.1} parent=1 // pred_region
      %91 = dma.done [#allocation9], 2048
    $region45: #{tpu_custom_call.1} parent=1 // pred_fallthru
      _
    %v92 = vld [vmem:[#allocation2] sm:$0xff]
    %v93 = vld [vmem:[#allocation2 + $0x8] sm:$0xff]
    %v94 = vld [vmem:[#allocation7] sm:$0xff]
    %v95 = vld [vmem:[#allocation7 + $0x8] sm:$0xff]
    %v96 = vld [vmem:[#allocation7 + $0x10] sm:$0xff]
    %v97 = vld [vmem:[#allocation7 + $0x18] sm:$0xff]
    %v98 = vld [vmem:[#allocation7 + $0x20] sm:$0xff]
    %v99 = vld [vmem:[#allocation7 + $0x28] sm:$0xff]
    %v100 = vld [vmem:[#allocation7 + $0x30] sm:$0xff]
    %v101 = vld [vmem:[#allocation7 + $0x38] sm:$0xff]
    %vm102 = vcmask 261120
    %v104 = vsel %vm102, %v92, 0
    %v107 = vsel %vm102, %v93, 0
    %109 = vmatprep.subr.mxu0 %v95
    %110 = vmatpush1.msra.mxu0 %v94
    %111 = vmatprep.subr.mxu0 %v97
    %112 = vmatpush1.msra.mxu0 %v96
    %113 = vmatprep.subr.mxu0 %v99
    %114 = vmatpush1.msra.mxu0 %v98
    %115 = vmatprep.subr.mxu0 %v101
    %116 = vmatpush1.msra.mxu0 %v100
    %117 = vmatprep.subr.mxu0 0.0
    %118 = vmatpush1.msra.mxu0 0.0
    %119 = vmatprep.subr.mxu0 0.0
    %120 = vmatpush1.msra.mxu0 0.0
    %121 = vmatprep.subr.mxu0 0.0
    %122 = vmatpush1.msra.mxu0 0.0
    %123 = vmatprep.subr.mxu0 0.0
    %124 = vmatpush1.msra.mxu0 0.0
    %125 = vmatprep.subr.mxu0 0.0
    %126 = vmatpush1.msra.mxu0 0.0
    %127 = vmatprep.subr.mxu0 0.0
    %128 = vmatpush1.msra.mxu0 0.0
    %129 = vmatprep.subr.mxu0 0.0
    %130 = vmatpush1.msra.mxu0 0.0
    %131 = vmatprep.subr.mxu0 0.0
    %132 = vmatpush1.msra.mxu0 0.0
    %133 = vmatprep.subr.mxu0 0.0
    %134 = vmatpush1.msra.mxu0 0.0
    %135 = vmatprep.subr.mxu0 0.0
    %136 = vmatpush1.msra.mxu0 0.0
    %137 = vmatprep.subr.mxu0 0.0
    %138 = vmatpush1.msra.mxu0 0.0
    %139 = vmatprep.subr.mxu0 0.0
    %140 = vmatpush1.msra.mxu0 0.0
    %141 = vmatprep.subr.mxu0 0.0
    %142 = vmatpush1.msra.mxu0 0.0
    %143 = vmatprep.subr.mxu0 0.0
    %144 = vmatpush1.msra.mxu0 0.0
    %145 = vmatprep.subr.mxu0 0.0
    %146 = vmatpush1.msra.mxu0 0.0
    %147 = vmatprep.subr.mxu0 0.0
    %148 = vmatpush1.msra.mxu0 0.0
    %149 = vmatprep.subr.mxu0 0.0
    %150 = vmatpush1.msra.mxu0 0.0
    %151 = vmatprep.subr.mxu0 0.0
    %152 = vmatpush1.msra.mxu0 0.0
    %153 = vmatprep.subr.mxu0 0.0
    %154 = vmatpush1.msra.mxu0 0.0
    %155 = vmatprep.subr.mxu0 0.0
    %156 = vmatpush1.msra.mxu0 0.0
    %157 = vmatprep.subr.mxu0 0.0
    %158 = vmatpush1.msra.mxu0 0.0
    %159 = vmatprep.subr.mxu0 0.0
    %160 = vmatpush1.msra.mxu0 0.0
    %161 = vmatprep.subr.mxu0 0.0
    %162 = vmatpush1.msra.mxu0 0.0
    %163 = vmatprep.subr.mxu0 0.0
    %164 = vmatpush1.msra.mxu0 0.0
    %165 = vmatprep.subr.mxu0 0.0
    %166 = vmatpush1.msra.mxu0 0.0
    %167 = vmatprep.subr.mxu0 0.0
    %168 = vmatpush1.msra.mxu0 0.0
    %169 = vmatprep.subr.mxu0 0.0
    %170 = vmatpush1.msra.mxu0 0.0
    %171 = vmatprep.subr.mxu0 0.0
    %172 = vmatpush1.msra.mxu0 0.0
    %173 = vmatprep.mubr.f32.mxu0 0.0
    %174 = vmatmul.mubr.f32.gmra.mrb[0].mxu0 %v104
    %v175 = vpop.f32.mrb[0].mxu0
    %v176 = vadd.f32 0.0, %v175
    %v177 = vpop.f32.mrb[0].mxu0
    %v178 = vadd.f32 0.0, %v177
    %179 = vmatprep.mubr.f32.mxu0 0.0
    %180 = vmatmul.mubr.f32.gmra.mrb[0].mxu0 %v107
    %v181 = vpop.f32.mrb[0].mxu0
    %v182 = vadd.f32 0.0, %v181
    %v183 = vpop.f32.mrb[0].mxu0
    %v184 = vadd.f32 0.0, %v183
    %185 = vdwg.mxu0
    %v186 = vld [vmem:[#allocation5] sm:$0xff]
    %v187 = vld [vmem:[#allocation5 + $0x8] sm:$0xff]
    %v188 = vld [vmem:[#allocation8] sm:$0xff]
    %v189 = vld [vmem:[#allocation8 + $0x8] sm:$0xff]
    %v190 = vld [vmem:[#allocation8 + $0x10] sm:$0xff]
    %v191 = vld [vmem:[#allocation8 + $0x18] sm:$0xff]
    %vm192 = vcmask 130048
    %v194 = vsel %vm192, %v186, 0
    %v197 = vsel %vm192, %v187, 0
    %199 = vmatprep.subr.mxu0 %v189
    %200 = vmatpush1.msra.mxu0 %v188
    %201 = vmatprep.subr.mxu0 %v191
    %202 = vmatpush1.msra.mxu0 %v190
    %203 = vmatprep.subr.mxu0 0.0
    %204 = vmatpush1.msra.mxu0 0.0
    %205 = vmatprep.subr.mxu0 0.0
    %206 = vmatpush1.msra.mxu0 0.0
    %207 = vmatprep.subr.mxu0 0.0
    %208 = vmatpush1.msra.mxu0 0.0
    %209 = vmatprep.subr.mxu0 0.0
    %210 = vmatpush1.msra.mxu0 0.0
    %211 = vmatprep.subr.mxu0 0.0
    %212 = vmatpush1.msra.mxu0 0.0
    %213 = vmatprep.subr.mxu0 0.0
    %214 = vmatpush1.msra.mxu0 0.0
    %215 = vmatprep.subr.mxu0 0.0
    %216 = vmatpush1.msra.mxu0 0.0
    %217 = vmatprep.subr.mxu0 0.0
    %218 = vmatpush1.msra.mxu0 0.0
    %219 = vmatprep.subr.mxu0 0.0
    %220 = vmatpush1.msra.mxu0 0.0
    %221 = vmatprep.subr.mxu0 0.0
    %222 = vmatpush1.msra.mxu0 0.0
    %223 = vmatprep.subr.mxu0 0.0
    %224 = vmatpush1.msra.mxu0 0.0
    %225 = vmatprep.subr.mxu0 0.0
    %226 = vmatpush1.msra.mxu0 0.0
    %227 = vmatprep.subr.mxu0 0.0
    %228 = vmatpush1.msra.mxu0 0.0
    %229 = vmatprep.subr.mxu0 0.0
    %230 = vmatpush1.msra.mxu0 0.0
    %231 = vmatprep.subr.mxu0 0.0
    %232 = vmatpush1.msra.mxu0 0.0
    %233 = vmatprep.subr.mxu0 0.0
    %234 = vmatpush1.msra.mxu0 0.0
    %235 = vmatprep.subr.mxu0 0.0
    %236 = vmatpush1.msra.mxu0 0.0
    %237 = vmatprep.subr.mxu0 0.0
    %238 = vmatpush1.msra.mxu0 0.0
    %239 = vmatprep.subr.mxu0 0.0
    %240 = vmatpush1.msra.mxu0 0.0
    %241 = vmatprep.subr.mxu0 0.0
    %242 = vmatpush1.msra.mxu0 0.0
    %243 = vmatprep.subr.mxu0 0.0
    %244 = vmatpush1.msra.mxu0 0.0
    %245 = vmatprep.subr.mxu0 0.0
    %246 = vmatpush1.msra.mxu0 0.0
    %247 = vmatprep.subr.mxu0 0.0
    %248 = vmatpush1.msra.mxu0 0.0
    %249 = vmatprep.subr.mxu0 0.0
    %250 = vmatpush1.msra.mxu0 0.0
    %251 = vmatprep.subr.mxu0 0.0
    %252 = vmatpush1.msra.mxu0 0.0
    %253 = vmatprep.subr.mxu0 0.0
    %254 = vmatpush1.msra.mxu0 0.0
    %255 = vmatprep.subr.mxu0 0.0
    %256 = vmatpush1.msra.mxu0 0.0
    %257 = vmatprep.subr.mxu0 0.0
    %258 = vmatpush1.msra.mxu0 0.0
    %259 = vmatprep.subr.mxu0 0.0
    %260 = vmatpush1.msra.mxu0 0.0
    %261 = vmatprep.subr.mxu0 0.0
    %262 = vmatpush1.msra.mxu0 0.0
    %263 = vmatprep.mubr.f32.mxu0 0.0
    %264 = vmatmul.mubr.f32.gmra.mrb[0].mxu0 %v194
    %v265 = vpop.f32.mrb[0].mxu0
    %v266 = vadd.f32 0.0, %v265
    %v267 = vpop.f32.mrb[0].mxu0
    %v268 = vadd.f32 0.0, %v267
    %269 = vmatprep.mubr.f32.mxu0 0.0
    %270 = vmatmul.mubr.f32.gmra.mrb[0].mxu0 %v197
    %v271 = vpop.f32.mrb[0].mxu0
    %v272 = vadd.f32 0.0, %v271
    %v273 = vpop.f32.mrb[0].mxu0
    %v274 = vadd.f32 0.0, %v273
    %275 = vdwg.mxu0
    %v276 = vmul.f32 %v176, %v266
    %v277 = vmul.f32 %v182, %v272
    %v278 = vadd.f32 %v178, %v268
    %v279 = vadd.f32 %v184, %v274
    %v280 = vld [vmem:[#allocation10] sm:$0xff]
    %v281 = vld [vmem:[#allocation10 + $0x8] sm:$0xff]
    %v282 = vld [vmem:[#allocation10 + $0x10] sm:$0xff]
    %v283 = vld [vmem:[#allocation10 + $0x18] sm:$0xff]
    %v284 = vld [vmem:[#allocation10 + $0x20] sm:$0xff]
    %v285 = vld [vmem:[#allocation10 + $0x28] sm:$0xff]
    %v286 = vld [vmem:[#allocation10 + $0x30] sm:$0xff]
    %v287 = vld [vmem:[#allocation10 + $0x38] sm:$0xff]
    %v288 = vld [vmem:[#allocation10 + $0x40] sm:$0xff]
    %v289 = vld [vmem:[#allocation10 + $0x48] sm:$0xff]
    %v290 = vld [vmem:[#allocation10 + $0x50] sm:$0xff]
    %v291 = vld [vmem:[#allocation10 + $0x58] sm:$0xff]
    %v292 = vld [vmem:[#allocation10 + $0x60] sm:$0xff]
    %v293 = vld [vmem:[#allocation10 + $0x68] sm:$0xff]
    %v294 = vld [vmem:[#allocation10 + $0x70] sm:$0xff]
    %v295 = vld [vmem:[#allocation10 + $0x78] sm:$0xff]
    %296 = vmatprep.subr.mxu0 0.0
    %297 = vmatpush1.msra.mxu0 %v280
    %298 = vmatprep.subr.mxu0 0.0
    %299 = vmatpush1.msra.mxu0 %v281
    %300 = vmatprep.subr.mxu0 0.0
    %301 = vmatpush1.msra.mxu0 %v282
    %302 = vmatprep.subr.mxu0 0.0
    %303 = vmatpush1.msra.mxu0 %v283
    %304 = vmatprep.subr.mxu0 0.0
    %305 = vmatpush1.msra.mxu0 %v284
    %306 = vmatprep.subr.mxu0 0.0
    %307 = vmatpush1.msra.mxu0 %v285
    %308 = vmatprep.subr.mxu0 0.0
    %309 = vmatpush1.msra.mxu0 %v286
    %310 = vmatprep.subr.mxu0 0.0
    %311 = vmatpush1.msra.mxu0 %v287
    %312 = vmatprep.subr.mxu0 0.0
    %313 = vmatpush1.msra.mxu0 %v288
    %314 = vmatprep.subr.mxu0 0.0
    %315 = vmatpush1.msra.mxu0 %v289
    %316 = vmatprep.subr.mxu0 0.0
    %317 = vmatpush1.msra.mxu0 %v290
    %318 = vmatprep.subr.mxu0 0.0
    %319 = vmatpush1.msra.mxu0 %v291
    %320 = vmatprep.subr.mxu0 0.0
    %321 = vmatpush1.msra.mxu0 %v292
    %322 = vmatprep.subr.mxu0 0.0
    %323 = vmatpush1.msra.mxu0 %v293
    %324 = vmatprep.subr.mxu0 0.0
    %325 = vmatpush1.msra.mxu0 %v294
    %326 = vmatprep.subr.mxu0 0.0
    %327 = vmatpush1.msra.mxu0 %v295
    %328 = vmatprep.subr.mxu0 0.0
    %329 = vmatpush1.msra.mxu0 0.0
    %330 = vmatprep.subr.mxu0 0.0
    %331 = vmatpush1.msra.mxu0 0.0
    %332 = vmatprep.subr.mxu0 0.0
    %333 = vmatpush1.msra.mxu0 0.0
    %334 = vmatprep.subr.mxu0 0.0
    %335 = vmatpush1.msra.mxu0 0.0
    %336 = vmatprep.subr.mxu0 0.0
    %337 = vmatpush1.msra.mxu0 0.0
    %338 = vmatprep.subr.mxu0 0.0
    %339 = vmatpush1.msra.mxu0 0.0
    %340 = vmatprep.subr.mxu0 0.0
    %341 = vmatpush1.msra.mxu0 0.0
    %342 = vmatprep.subr.mxu0 0.0
    %343 = vmatpush1.msra.mxu0 0.0
    %344 = vmatprep.subr.mxu0 0.0
    %345 = vmatpush1.msra.mxu0 0.0
    %346 = vmatprep.subr.mxu0 0.0
    %347 = vmatpush1.msra.mxu0 0.0
    %348 = vmatprep.subr.mxu0 0.0
    %349 = vmatpush1.msra.mxu0 0.0
    %350 = vmatprep.subr.mxu0 0.0
    %351 = vmatpush1.msra.mxu0 0.0
    %352 = vmatprep.subr.mxu0 0.0
    %353 = vmatpush1.msra.mxu0 0.0
    %354 = vmatprep.subr.mxu0 0.0
    %355 = vmatpush1.msra.mxu0 0.0
    %356 = vmatprep.subr.mxu0 0.0
    %357 = vmatpush1.msra.mxu0 0.0
    %358 = vmatprep.subr.mxu0 0.0
    %359 = vmatpush1.msra.mxu0 0.0
    %360 = vmatprep.mubr.f32.mxu0 0.0
    %361 = vmatmul.mubr.f32.gmra.mrb[0].mxu0 %v276
    %v362 = vpop.f32.mrb[0].mxu0
    %v363 = vadd.f32 %v278, %v362
    %v364 = vpop.f32.mrb[0].mxu0
    %365 = vmatprep.mubr.f32.mxu0 0.0
    %366 = vmatmul.mubr.f32.gmra.mrb[0].mxu0 %v277
    %v367 = vpop.f32.mrb[0].mxu0
    %v368 = vadd.f32 %v279, %v367
    %v369 = vpop.f32.mrb[0].mxu0
    %370 = vdwg.mxu0
    %v371 = vld [vmem:[%s5] sm:$0x1]
    %v373 = vlaneseq
    %v374 = vshrl.u32 %v373, 7
    %v375 = vsub.s32 0, %v374
    %v376 = vrot.slane %v371, %v375
    %v378 = vadd.f32 %v363, %v376
    %v379 = vadd.f32 %v368, %v376
    %380 = vst [vmem:[#allocation11] sm:$0xff] %v378
    %381 = vst [vmem:[#allocation11 + $0x8] sm:$0xff] %v379
    // Predicated region
    $region46: #{tpu_custom_call.1} parent=1 // pred_check
      _
    $region47: #{tpu_custom_call.1} parent=1 // pred_check_branch
      %383 = sbr.rel (0) target = $region49
    $region48: #{tpu_custom_call.1} parent=1 // pred_region
      %s385 = ssub.s32 256, 256
      %386 = vsyncadd [#allocation4], %s385
      %s387 = sshll.u32 [#allocation11], 4
      %s388 = int_to_ptr.vmem [resolvable:$true] %s387
      %393 = dma.vmem_to_hbm [thread:$0]  %s388, 256, %s6, [#allocation4], 128, 128, 8
    $region49: #{tpu_custom_call.1} parent=1 // pred_fallthru
      _
    // Predicated region
    $region50: #{tpu_custom_call.1} parent=1 // pred_check
      _
    $region51: #{tpu_custom_call.1} parent=1 // pred_check_branch
      %395 = sbr.rel (0) target = $region53
    $region52: #{tpu_custom_call.1} parent=1 // pred_region
      %396 = dma.done [#allocation4], 256
    $region53: #{tpu_custom_call.1} parent=1 // pred_fallthru
      _
    %397 = vsyncpa [#allocation3], 1
    %398 = vsyncpa [#allocation6], 1
    %399 = vsyncpa [#allocation9], 1
    %400 = vsyncpa [#allocation4], 1

</llo_original>
